<compile_context>
chip_gen: v7x
topology: tpu7x:2x2x1
jax: 0.10.0
libtpu: 0.0.40
codegen_flags: <defaults>
</compile_context>

<pallas_src>
import jax
import jax.numpy as jnp
import numpy as np
from jax.experimental import pallas as pl
from jax.experimental.pallas import tpu as pltpu

_LANE = 128


def channel_gate3d(x, w1, b1, w2, b2, *, ts_max=2048):
    """x: (B, C, D, H, W); w1: (C, Cr); b1: (Cr,); w2: (Cr, C); b2: (C,)."""
    B, C, D, H, W = x.shape
    S = D * H * W
    x3 = x.reshape(B, C, S)
    itemsize = jnp.dtype(x.dtype).itemsize

    # Spatial tile size: lane-dense multiple of 128, capped at ts_max.
    if S <= ts_max:
        TS = ((S + _LANE - 1) // _LANE) * _LANE
    else:
        TS = ts_max
    S_pad = ((S + TS - 1) // TS) * TS
    n_s = S_pad // TS
    needs_mask = (S_pad != S)

    x3p = jnp.pad(x3, ((0, 0), (0, 0), (0, S_pad - S))) if needs_mask else x3

    # ---------------- pass 1: fused sum + max pooling over spatial tiles ----
    def pool_kernel(x_ref, sum_ref, max_ref):
        s = pl.program_id(1)
        xt = x_ref[0]                               # (C, TS), native dtype
        xf = xt.astype(jnp.float32)                 # cast only for the reduction
        if needs_mask:
            col = jax.lax.broadcasted_iota(jnp.int32, (C, TS), 1) + s * TS
            valid = col < S
            xs = jnp.where(valid, xf, 0.0)
            xm = jnp.where(valid, xf, -jnp.inf)
        else:
            xs = xf
            xm = xf
        tile_sum = jnp.sum(xs, axis=1, keepdims=True)    # (C, 1) f32
        tile_max = jnp.max(xm, axis=1, keepdims=True)    # (C, 1) f32

        @pl.when(s == 0)
        def _():
            sum_ref[0] = tile_sum
            max_ref[0] = tile_max

        @pl.when(s > 0)
        def _():
            sum_ref[0] = sum_ref[0] + tile_sum
            max_ref[0] = jnp.maximum(max_ref[0], tile_max)

    pool_cost = pl.CostEstimate(
        flops=2 * B * C * S_pad,
        transcendentals=0,
        bytes_accessed=B * C * S_pad * itemsize + 2 * B * C * 4)

    sum_pool, max_pool = pl.pallas_call(
        pool_kernel,
        out_shape=(jax.ShapeDtypeStruct((B, C, 1), jnp.float32),
                   jax.ShapeDtypeStruct((B, C, 1), jnp.float32)),
        grid_spec=pltpu.PrefetchScalarGridSpec(
            num_scalar_prefetch=0,
            grid=(B, n_s),
            in_specs=[pl.BlockSpec((1, C, TS), lambda b, s: (b, 0, s))],
            out_specs=(pl.BlockSpec((1, C, 1), lambda b, s: (b, 0, 0)),
                       pl.BlockSpec((1, C, 1), lambda b, s: (b, 0, 0))),
        ),
        compiler_params=pltpu.CompilerParams(
            dimension_semantics=("parallel", "arbitrary")),
        cost_estimate=pool_cost,
    )(x3p)

    # ------------- tiny shared MLP + sigmoid in plain JAX (negligible work) --
    avg = sum_pool[..., 0] * (1.0 / S)               # (B, C)
    mx = max_pool[..., 0]                            # (B, C)
    w1f, b1f = w1.astype(jnp.float32), b1.astype(jnp.float32)
    w2f, b2f = w2.astype(jnp.float32), b2.astype(jnp.float32)
    pools = jnp.concatenate([avg, mx], axis=0)       # (2B, C): one batched MLP call
    h = jnp.maximum(pools @ w1f + b1f, 0.0)
    att2 = h @ w2f + b2f                             # (2B, C)
    att = att2[:B] + att2[B:]                        # avg path + max path
    scale = jax.nn.sigmoid(att).astype(x.dtype).reshape(B, C, 1)

    # ---------------- pass 2: lane-dense scale application ------------------
    def apply_kernel(x_ref, scale_ref, o_ref):
        # one vmul per vreg in native dtype; scale (C,1) broadcasts over lanes
        o_ref[0] = (x_ref[0] * scale_ref[0]).astype(o_ref.dtype)

    apply_cost = pl.CostEstimate(
        flops=B * C * S_pad,
        transcendentals=0,
        bytes_accessed=2 * B * C * S_pad * itemsize + B * C * itemsize)

    out = pl.pallas_call(
        apply_kernel,
        out_shape=jax.ShapeDtypeStruct((B, C, S_pad), x.dtype),
        grid_spec=pltpu.PrefetchScalarGridSpec(
            num_scalar_prefetch=0,
            grid=(B, n_s),
            in_specs=[pl.BlockSpec((1, C, TS), lambda b, s: (b, 0, s)),
                      pl.BlockSpec((1, C, 1), lambda b, s: (b, 0, 0))],
            out_specs=pl.BlockSpec((1, C, TS), lambda b, s: (b, 0, s)),
        ),
        compiler_params=pltpu.CompilerParams(
            dimension_semantics=("parallel", "parallel")),
        cost_estimate=apply_cost,
    )(x3p, scale)

    if needs_mask:
        out = out[:, :, :S]
    return out.reshape(B, C, D, H, W)


def channel_gate3d_ref(x, w1, b1, w2, b2):
    """Pure-JAX reference matching the PyTorch forward semantics."""
    xf = x.astype(jnp.float32)
    avg = jnp.mean(xf, axis=(2, 3, 4))          # (B, C)
    mx = jnp.max(xf, axis=(2, 3, 4))            # (B, C)

    def mlp(p):
        h = jnp.maximum(p @ w1 + b1, 0.0)
        return h @ w2 + b2

    att = mlp(avg) + mlp(mx)
    scale = jax.nn.sigmoid(att)[:, :, None, None, None]
    return (xf * scale).astype(x.dtype)


if __name__ == "__main__":
    # gate_channels=64, reduction_ratio=16  ->  Cr=4
    B, C = 2, 64
    Cr = C // 16

    key = jax.random.PRNGKey(0)
    kx1, kx2, kw1, kb1, kw2, kb2 = jax.random.split(key, 6)

    bound1 = 1.0 / np.sqrt(C)
    w1 = jax.random.uniform(kw1, (C, Cr), jnp.float32, -bound1, bound1)
    b1 = jax.random.uniform(kb1, (Cr,), jnp.float32, -bound1, bound1)
    bound2 = 1.0 / np.sqrt(Cr)
    w2 = jax.random.uniform(kw2, (Cr, C), jnp.float32, -bound2, bound2)
    b2 = jax.random.uniform(kb2, (C,), jnp.float32, -bound2, bound2)

    # Case 1: spatial size already lane-aligned (4*8*8 = 256).
    x1 = jax.random.normal(kx1, (B, C, 4, 8, 8), dtype=jnp.float32)
    out1 = jax.block_until_ready(channel_gate3d(x1, w1, b1, w2, b2))
    ref1 = channel_gate3d_ref(x1, w1, b1, w2, b2)
    np.testing.assert_allclose(np.asarray(out1), np.asarray(ref1),
                               rtol=1e-5, atol=1e-5)

    # Case 2: odd spatial size (3*5*7 = 105) -> exercises lane padding + masking.
    x2 = jax.random.normal(kx2, (B, C, 3, 5, 7), dtype=jnp.float32)
    out2 = jax.block_until_ready(channel_gate3d(x2, w1, b1, w2, b2))
    ref2 = channel_gate3d_ref(x2, w1, b1, w2, b2)
    np.testing.assert_allclose(np.asarray(out2), np.asarray(ref2),
                               rtol=1e-5, atol=1e-5)

    print("KERNEL_OK")
</pallas_src>

<mosaic_0001>
module attributes {stable_mosaic.version = 11 : i64} {
  func.func @pool_kernel(%arg0: i32, %arg1: i32, %arg2: memref<1x64x256xf32, #tpu.memory_space<vmem>>, %arg3: memref<1x64x1xf32, #tpu.memory_space<vmem>>, %arg4: memref<1x64x1xf32, #tpu.memory_space<vmem>>) attributes {dimension_semantics = [#tpu.dimension_semantics<parallel>, #tpu.dimension_semantics<arbitrary>], iteration_bounds = array<i64: 2, 1>, scalar_prefetch = 0 : i64, scratch_operands = 0 : i64, tpu.core_type = #tpu.core_type<tc>, window_params = [{transform_indices = @transform_0, window_bounds = array<i64: 1, 64, 256>}, {transform_indices = @transform_1, window_bounds = array<i64: 1, 64, 1>}, {transform_indices = @transform_2, window_bounds = array<i64: 1, 64, 1>}]} {
    %c0 = arith.constant 0 : index
    %c0_0 = arith.constant 0 : index
    %c0_1 = arith.constant 0 : index
    %0 = vector.load %arg2[%c0, %c0_0, %c0_1] : memref<1x64x256xf32, #tpu.memory_space<vmem>>, vector<1x64x256xf32>
    %1 = vector.shape_cast %0 : vector<1x64x256xf32> to vector<64x256xf32>
    %cst = arith.constant dense<0.000000e+00> : vector<64xf32>
    %2 = vector.multi_reduction <add>, %1, %cst [1] : vector<64x256xf32> to vector<64xf32>
    %3 = vector.shape_cast %2 : vector<64xf32> to vector<64x1xf32>
    %cst_2 = arith.constant dense<0xFF800000> : vector<64xf32>
    %4 = vector.multi_reduction <maximumf>, %1, %cst_2 [1] : vector<64x256xf32> to vector<64xf32>
    %5 = vector.shape_cast %4 : vector<64xf32> to vector<64x1xf32>
    %c0_i32 = arith.constant 0 : i32
    %6 = arith.cmpi eq, %arg1, %c0_i32 : i32
    %7 = arith.extui %6 : i1 to i32
    %c0_i32_3 = arith.constant 0 : i32
    %8 = arith.cmpi ne, %7, %c0_i32_3 : i32
    scf.if %8 {
      %c0_6 = arith.constant 0 : index
      %c0_7 = arith.constant 0 : index
      %c0_8 = arith.constant 0 : index
      %12 = vector.load %arg3[%c0_6, %c0_7, %c0_8] : memref<1x64x1xf32, #tpu.memory_space<vmem>>, vector<1x64x1xf32>
      %13 = vector.shape_cast %12 : vector<1x64x1xf32> to vector<64x1xf32>
      %14 = vector.shape_cast %3 : vector<64x1xf32> to vector<1x64x1xf32>
      tpu.vector_store %arg3[%c0_6, %c0_7, %c0_8], %14 {strides = array<i32>} : memref<1x64x1xf32, #tpu.memory_space<vmem>>, vector<1x64x1xf32>,
      %c0_9 = arith.constant 0 : index
      %c0_10 = arith.constant 0 : index
      %c0_11 = arith.constant 0 : index
      %15 = vector.load %arg4[%c0_9, %c0_10, %c0_11] : memref<1x64x1xf32, #tpu.memory_space<vmem>>, vector<1x64x1xf32>
      %16 = vector.shape_cast %15 : vector<1x64x1xf32> to vector<64x1xf32>
      %17 = vector.shape_cast %5 : vector<64x1xf32> to vector<1x64x1xf32>
      tpu.vector_store %arg4[%c0_9, %c0_10, %c0_11], %17 {strides = array<i32>} : memref<1x64x1xf32, #tpu.memory_space<vmem>>, vector<1x64x1xf32>,
    } else {
    }
    %c0_i32_4 = arith.constant 0 : i32
    %9 = arith.cmpi sgt, %arg1, %c0_i32_4 : i32
    %10 = arith.extui %9 : i1 to i32
    %c0_i32_5 = arith.constant 0 : i32
    %11 = arith.cmpi ne, %10, %c0_i32_5 : i32
    scf.if %11 {
      %c0_6 = arith.constant 0 : index
      %c0_7 = arith.constant 0 : index
      %c0_8 = arith.constant 0 : index
      %12 = vector.load %arg3[%c0_6, %c0_7, %c0_8] : memref<1x64x1xf32, #tpu.memory_space<vmem>>, vector<1x64x1xf32>
      %13 = vector.shape_cast %12 : vector<1x64x1xf32> to vector<64x1xf32>
      %14 = arith.addf %13, %3 : vector<64x1xf32>
      %c0_9 = arith.constant 0 : index
      %c0_10 = arith.constant 0 : index
      %c0_11 = arith.constant 0 : index
      %15 = vector.load %arg3[%c0_9, %c0_10, %c0_11] : memref<1x64x1xf32, #tpu.memory_space<vmem>>, vector<1x64x1xf32>
      %16 = vector.shape_cast %15 : vector<1x64x1xf32> to vector<64x1xf32>
      %17 = vector.shape_cast %14 : vector<64x1xf32> to vector<1x64x1xf32>
      tpu.vector_store %arg3[%c0_9, %c0_10, %c0_11], %17 {strides = array<i32>} : memref<1x64x1xf32, #tpu.memory_space<vmem>>, vector<1x64x1xf32>,
      %c0_12 = arith.constant 0 : index
      %c0_13 = arith.constant 0 : index
      %c0_14 = arith.constant 0 : index
      %18 = vector.load %arg4[%c0_12, %c0_13, %c0_14] : memref<1x64x1xf32, #tpu.memory_space<vmem>>, vector<1x64x1xf32>
      %19 = vector.shape_cast %18 : vector<1x64x1xf32> to vector<64x1xf32>
      %20 = arith.maximumf %19, %5 : vector<64x1xf32>
      %c0_15 = arith.constant 0 : index
      %c0_16 = arith.constant 0 : index
      %c0_17 = arith.constant 0 : index
      %21 = vector.load %arg4[%c0_15, %c0_16, %c0_17] : memref<1x64x1xf32, #tpu.memory_space<vmem>>, vector<1x64x1xf32>
      %22 = vector.shape_cast %21 : vector<1x64x1xf32> to vector<64x1xf32>
      %23 = vector.shape_cast %20 : vector<64x1xf32> to vector<1x64x1xf32>
      tpu.vector_store %arg4[%c0_15, %c0_16, %c0_17], %23 {strides = array<i32>} : memref<1x64x1xf32, #tpu.memory_space<vmem>>, vector<1x64x1xf32>,
    } else {
    }
    return
  }
  func.func @transform_0(%arg0: i32, %arg1: i32) -> (i32, i32, i32) {
    %c0_i32 = arith.constant 0 : i32
    %c0_i32_0 = arith.constant 0 : i32
    return %arg0, %c0_i32, %arg1 : i32, i32, i32
  }
  func.func @transform_1(%arg0: i32, %arg1: i32) -> (i32, i32, i32) {
    %c0_i32 = arith.constant 0 : i32
    %c0_i32_0 = arith.constant 0 : i32
    %c0_i32_1 = arith.constant 0 : i32
    return %arg0, %c0_i32, %c0_i32_0 : i32, i32, i32
  }
  func.func @transform_2(%arg0: i32, %arg1: i32) -> (i32, i32, i32) {
    %c0_i32 = arith.constant 0 : i32
    %c0_i32_0 = arith.constant 0 : i32
    %c0_i32_1 = arith.constant 0 : i32
    return %arg0, %c0_i32, %c0_i32_0 : i32, i32, i32
  }
}

</mosaic_0001>

<llo_original>
// kernel: tpu_custom_call.1
$region0: #{tpu_custom_call.1}
  #allocation0 [shape = 'u32[]', space=smem, size = 0x4, offset = 0x4, fixed_abs, tag = 'smem constant byte address 0x4 - core index']
  #allocation1 [shape = 'u32[144,128]{1,0:T(1,128)}', space=vmem, size = 0x12000, scoped, tag = 'internal scratch']
  %s0 = inlined_call_operand.hbm [shape: f32[2,64,256], index: 0, kind: input, shape index: {}]
  %s1 = inlined_call_operand.vmem [shape: f32[2,64,1], index: 1, kind: output, shape index: {0}]
  %s2 = inlined_call_operand.vmem [shape: f32[2,64,1], index: 2, kind: output, shape index: {1}]
  %3 = xla_tuple %s1, %s2
  %s4 = sld [smem:[#allocation0]]
  $region57: #{tpu_custom_call.1} parent=0
    _
  %s6 = ssub.s32 1, %s4
  %s7 = scalar_select 0, %s6, %s4
  $region1: #{tpu_custom_call.1} parent=0
    #allocation2 [shape = 'u8[131072]{0}', space=vmem, size = 0x20000, scoped, tag = 'input window, operand 0']
    #allocation3 [shape = 's32[2]{0}', space=sflag, size = 0x8, scoped, tag = 'scoped memory for tpu_custom_call.1']
    %8 = vsyncpa [#allocation3], 0
    %s9 = scalar_lea.sflag [#allocation3], 1
    %10 = vsyncpa %s9, 0
    loop: start=0, step=1, limit=4
    $region2: #{tpu_custom_call.1} parent=1 // loop_pre_header
      _
    $region3: #{tpu_custom_call.1} parent=1 // loop_header
      %s12 = sphi 0, %s16
      %p13 = scmp.ge.s32.totalorder %s12, 4
      %s19 = sphi 0, %s31
      %s20 = sphi 0, %s27
      %s21 = sphi 0, %s19
      %s22 = sphi 0, %s20
      %s23 = sphi 0, %s21
      %s24 = sphi 0, %s22
      %s36 = sphi 0, %s38
      %s39 = sphi 0, %s36
      %s40 = sphi 0, %s39
      %s56 = sphi 0, %s40
      %s62 = sphi 0, %s64
      %s65 = sphi 0, %s62
      %s66 = sphi 0, %s65
      %s82 = sphi 0, %s66
      %s88 = sphi 0, %s90
      %s91 = sphi 0, %s88
      %s92 = sphi 0, %s91
      %s108 = sphi 0, %s92
    $region4: #{tpu_custom_call.1} parent=1 // loop_header_branch
      %15 = sbr.rel (%p13) target = $region8
    $region5: #{tpu_custom_call.1} parent=1 // loop_body
      %s17 = ssub.s32 %s12, 1
      %s18 = ssub.s32 %s12, 2
      %s25 = sadd.s32 1, %s20
      %p26 = scmp.ge.s32.totalorder %s25, 1
      %s27 = scalar_select %p26, 0, %s25
      %s28 = sadd.s32 1, %s19
      %s29 = scalar_select %p26, %s28, %s19
      %p30 = scmp.ge.s32.totalorder %s29, 2
      %s31 = scalar_select %p30, 0, %s29
      %s32 = ssub.s32 %s19, %s31
      %s33 = ssub.s32 %s20, %s27
      %s34 = sor.u32 %s32, %s33
      %p35 = scmp.eq.s32.totalorder %s34, 0
      %s37 = sadd.s32 %s36, 1
      %s38 = scalar_select %p35, %s36, %s37
      %p41 = pneg %p35
      %p42 = scmp.eq.s32.totalorder %s12, 1
      %p43 = por %p41, %p42
      %p44 = scmp.ne.s32.totalorder %s36, %s39
      %p45 = scmp.eq.s32.totalorder %s12, 0
      %p46 = por %p44, %p45
      %p47 = scmp.ne.s32.totalorder %s36, %s39
      %p48 = scmp.eq.s32.totalorder %s17, 1
      %p49 = por %p47, %p48
      %p50 = scmp.ne.s32.totalorder %s39, %s40
      %p51 = scmp.eq.s32.totalorder %s17, 0
      %p52 = por %p50, %p51
      %p53 = scmp.ne.s32.totalorder %s39, %s40
      %p54 = scmp.eq.s32.totalorder %s18, 1
      %p55 = por %p53, %p54
      %p57 = scmp.ne.s32.totalorder %s40, %s56
      %p58 = scmp.eq.s32.totalorder %s18, 0
      %p59 = por %p57, %p58
      %s60 = ssub.s32 %s19, %s31
      %p61 = scmp.eq.s32.totalorder %s60, 0
      %s63 = sadd.s32 %s62, 1
      %s64 = scalar_select %p61, %s62, %s63
      %p67 = pneg %p61
      %p68 = scmp.eq.s32.totalorder %s12, 1
      %p69 = por %p67, %p68
      %p70 = scmp.ne.s32.totalorder %s62, %s65
      %p71 = scmp.eq.s32.totalorder %s12, 0
      %p72 = por %p70, %p71
      %p73 = scmp.ne.s32.totalorder %s62, %s65
      %p74 = scmp.eq.s32.totalorder %s17, 1
      %p75 = por %p73, %p74
      %p76 = scmp.ne.s32.totalorder %s65, %s66
      %p77 = scmp.eq.s32.totalorder %s17, 0
      %p78 = por %p76, %p77
      %p79 = scmp.ne.s32.totalorder %s65, %s66
      %p80 = scmp.eq.s32.totalorder %s18, 1
      %p81 = por %p79, %p80
      %p83 = scmp.ne.s32.totalorder %s66, %s82
      %p84 = scmp.eq.s32.totalorder %s18, 0
      %p85 = por %p83, %p84
      %s86 = ssub.s32 %s19, %s31
      %p87 = scmp.eq.s32.totalorder %s86, 0
      %s89 = sadd.s32 %s88, 1
      %s90 = scalar_select %p87, %s88, %s89
      %p93 = pneg %p87
      %p94 = scmp.eq.s32.totalorder %s12, 1
      %p95 = por %p93, %p94
      %p96 = scmp.ne.s32.totalorder %s88, %s91
      %p97 = scmp.eq.s32.totalorder %s12, 0
      %p98 = por %p96, %p97
      %p99 = scmp.ne.s32.totalorder %s88, %s91
      %p100 = scmp.eq.s32.totalorder %s17, 1
      %p101 = por %p99, %p100
      %p102 = scmp.ne.s32.totalorder %s91, %s92
      %p103 = scmp.eq.s32.totalorder %s17, 0
      %p104 = por %p102, %p103
      %p105 = scmp.ne.s32.totalorder %s91, %s92
      %p106 = scmp.eq.s32.totalorder %s18, 1
      %p107 = por %p105, %p106
      %p109 = scmp.ne.s32.totalorder %s92, %s108
      %p110 = scmp.eq.s32.totalorder %s18, 0
      %p111 = por %p109, %p110
      %p112 = scmp.le.s32.totalorder 1, %s12
      %p113 = scmp.lt.s32.totalorder %s12, 3
      %p114 = pnand %p112, %p113
      %p115 = pneg %p114
      // Predicated region
      $region9: #{tpu_custom_call.1} parent=5 // pred_check
        _
      $region10: #{tpu_custom_call.1} parent=5 // pred_check_branch
        %117 = sbr.rel (%p114) target = $region12
      $region11: #{tpu_custom_call.1} parent=5 // pred_region
        %s118 = ssub.s32 %s12, 1
      $region12: #{tpu_custom_call.1} parent=5 // pred_fallthru
        _
      %p119 = scmp.lt.s32.totalorder %s12, 2
      // Predicated region
      $region13: #{tpu_custom_call.1} parent=5 // pred_check
        %p120 = pneg %p119
      $region14: #{tpu_custom_call.1} parent=5 // pred_check_branch
        %122 = sbr.rel (%p120) target = $region16
      $region15: #{tpu_custom_call.1} parent=5 // pred_region
        // Predicated region
        $region17: #{tpu_custom_call.1} parent=15 // pred_check
          %p123 = pneg %p46
        $region18: #{tpu_custom_call.1} parent=15 // pred_check_branch
          %125 = sbr.rel (%p123) target = $region20
        $region19: #{tpu_custom_call.1} parent=15 // pred_region
          %s126 = sand.u32 %s36, 1
          %s127 = scalar_lea.sflag [#allocation3], %s126
          %s128 = sand.u32 %s36, 1
          %s129 = smul.addr %s128, 128
          %s130 = scalar_lea.vmem [#allocation2], %s129
          %s131 = smul.u32 2, %s20
          %s133 = ssub.s32 2048, 2048
          %134 = vsyncadd %s127, %s133
          %s135 = smul.addr %s19, 16
          %s136 = sadd.s32 %s131, %s135
          %s137 = smul.addr %s136, 128
          %s138 = scalar_lea.hbm %s0, %s137
          %s139 = sshll.u32 %s130, 4
          %s140 = int_to_ptr.vmem [resolvable:$true] %s139
          %145 = dma.hbm_to_vmem [thread:$0]  %s138, 2048, %s140, %s127, 256, 256, 16
        $region20: #{tpu_custom_call.1} parent=15 // pred_fallthru
          _
      $region16: #{tpu_custom_call.1} parent=5 // pred_fallthru
        _
      %p146 = scmp.le.s32.totalorder 1, %s12
      %p147 = scmp.lt.s32.totalorder %s12, 3
      %p148 = pnand %p146, %p147
      %p149 = pneg %p148
      // Predicated region
      $region21: #{tpu_custom_call.1} parent=5 // pred_check
        _
      $region22: #{tpu_custom_call.1} parent=5 // pred_check_branch
        %151 = sbr.rel (%p148) target = $region24
      $region23: #{tpu_custom_call.1} parent=5 // pred_region
        %s152 = ssub.s32 %s12, 1
        %s153 = sand.u32 %s39, 1
        %s154 = scalar_lea.sflag [#allocation3], %s153
        %s155 = sand.u32 %s39, 1
        %s156 = smul.addr %s155, 128
        %s157 = scalar_lea.vmem [#allocation2], %s156
        // Predicated region
        $region25: #{tpu_custom_call.1} parent=23 // pred_check
          %p158 = pneg %p52
        $region26: #{tpu_custom_call.1} parent=23 // pred_check_branch
          %160 = sbr.rel (%p158) target = $region28
        $region27: #{tpu_custom_call.1} parent=23 // pred_region
          %161 = dma.done %s154, 2048
        $region28: #{tpu_custom_call.1} parent=23 // pred_fallthru
          _
        %s162 = sand.u32 %s39, 1
        %s163 = scalar_lea.sflag [#allocation3], %s162
        %s164 = sand.u32 %s39, 1
        %s165 = smul.addr %s164, 128
        %s166 = scalar_lea.vmem [#allocation2], %s165
        %p167 = pneg %p52
        %p168 = pneg %p49
        %p169 = pneg %p78
        %p170 = pneg %p75
        %p171 = scmp.lt.s32.totalorder %s21, 1
        %s172 = scalar_select %p171, %s21, 1
        %s173 = smul.addr %s172, 8
        %s174 = smul.addr %s173, 8
        %s175 = scalar_lea.vmem %s1, %s174
        %p176 = pneg %p104
        %p177 = pneg %p101
        %p178 = scmp.lt.s32.totalorder %s21, 1
        %s179 = scalar_select %p178, %s21, 1
        %s180 = smul.addr %s179, 8
        %s181 = smul.addr %s180, 8
        %s182 = scalar_lea.vmem %s2, %s181
        %s183 = smul.u32 2, %s22
        %p184 = scmp.lt.s32.totalorder %s21, 1
        %s185 = scalar_select %p184, %s21, 1
        %s186 = smul.addr %s185, 8
        %s187 = smul.addr %s186, 8
        %s188 = scalar_lea.vmem %s1, %s187
        %p189 = scmp.lt.s32.totalorder %s21, 1
        %s190 = scalar_select %p189, %s21, 1
        %s191 = smul.addr %s190, 8
        %s192 = smul.addr %s191, 8
        %s193 = scalar_lea.vmem %s2, %s192
        %v194 = vld [vmem:[%s157] sm:$0xff]
        %v195 = vld [vmem:[%s157 + $0x8] sm:$0xff]
        %v196 = vld [vmem:[%s157 + $0x10] sm:$0xff]
        %v197 = vld [vmem:[%s157 + $0x18] sm:$0xff]
        %v198 = vld [vmem:[%s157 + $0x20] sm:$0xff]
        %v199 = vld [vmem:[%s157 + $0x28] sm:$0xff]
        %v200 = vld [vmem:[%s157 + $0x30] sm:$0xff]
        %v201 = vld [vmem:[%s157 + $0x38] sm:$0xff]
        %v202 = vld [vmem:[%s157 + $0x40] sm:$0xff]
        %v203 = vld [vmem:[%s157 + $0x48] sm:$0xff]
        %v204 = vld [vmem:[%s157 + $0x50] sm:$0xff]
        %v205 = vld [vmem:[%s157 + $0x58] sm:$0xff]
        %v206 = vld [vmem:[%s157 + $0x60] sm:$0xff]
        %v207 = vld [vmem:[%s157 + $0x68] sm:$0xff]
        %v208 = vld [vmem:[%s157 + $0x70] sm:$0xff]
        %v209 = vld [vmem:[%s157 + $0x78] sm:$0xff]
        %v210 = vadd.f32 %v194, %v195
        %211 = vadd.xlane.f32.xlu0 %v210
        %v212 = vpop.xlane.xlu0 %211
        %v213 = vadd.f32 %v196, %v197
        %214 = vadd.xlane.f32.xlu0 %v213
        %v215 = vpop.xlane.xlu0 %214
        %v216 = vadd.f32 %v198, %v199
        %217 = vadd.xlane.f32.xlu0 %v216
        %v218 = vpop.xlane.xlu0 %217
        %v219 = vadd.f32 %v200, %v201
        %220 = vadd.xlane.f32.xlu0 %v219
        %v221 = vpop.xlane.xlu0 %220
        %v222 = vadd.f32 %v202, %v203
        %223 = vadd.xlane.f32.xlu0 %v222
        %v224 = vpop.xlane.xlu0 %223
        %v225 = vadd.f32 %v204, %v205
        %226 = vadd.xlane.f32.xlu0 %v225
        %v227 = vpop.xlane.xlu0 %226
        %v228 = vadd.f32 %v206, %v207
        %229 = vadd.xlane.f32.xlu0 %v228
        %v230 = vpop.xlane.xlu0 %229
        %v231 = vadd.f32 %v208, %v209
        %232 = vadd.xlane.f32.xlu0 %v231
        %v233 = vpop.xlane.xlu0 %232
        %v234 = vmax.f32 %v194, %v195
        %235 = vmax.xlane.f32.xlu0 %v234
        %v236 = vpop.xlane.xlu0 %235
        %v237 = vmax.f32 %v196, %v197
        %238 = vmax.xlane.f32.xlu0 %v237
        %v239 = vpop.xlane.xlu0 %238
        %v240 = vmax.f32 %v198, %v199
        %241 = vmax.xlane.f32.xlu0 %v240
        %v242 = vpop.xlane.xlu0 %241
        %v243 = vmax.f32 %v200, %v201
        %244 = vmax.xlane.f32.xlu0 %v243
        %v245 = vpop.xlane.xlu0 %244
        %v246 = vmax.f32 %v202, %v203
        %247 = vmax.xlane.f32.xlu0 %v246
        %v248 = vpop.xlane.xlu0 %247
        %v249 = vmax.f32 %v204, %v205
        %250 = vmax.xlane.f32.xlu0 %v249
        %v251 = vpop.xlane.xlu0 %250
        %v252 = vmax.f32 %v206, %v207
        %253 = vmax.xlane.f32.xlu0 %v252
        %v254 = vpop.xlane.xlu0 %253
        %v255 = vmax.f32 %v208, %v209
        %256 = vmax.xlane.f32.xlu0 %v255
        %v257 = vpop.xlane.xlu0 %256
        %p258 = scmp.eq.s32.totalorder %s22, 0
        // Predicated region
        $region29: #{tpu_custom_call.1} parent=23 // pred_check
          %p259 = pneg %p258
        $region30: #{tpu_custom_call.1} parent=23 // pred_check_branch
          %261 = sbr.rel (%p259) target = $region32
        $region31: #{tpu_custom_call.1} parent=23 // pred_region
          %vm262 = vcmask 7168
          %263 = vst.msk [vmem:[%s188] sm:$0xff] %vm262, %v212
          %264 = vst.msk [vmem:[%s188 + $0x8] sm:$0xff] %vm262, %v215
          %265 = vst.msk [vmem:[%s188 + $0x10] sm:$0xff] %vm262, %v218
          %266 = vst.msk [vmem:[%s188 + $0x18] sm:$0xff] %vm262, %v221
          %267 = vst.msk [vmem:[%s188 + $0x20] sm:$0xff] %vm262, %v224
          %268 = vst.msk [vmem:[%s188 + $0x28] sm:$0xff] %vm262, %v227
          %269 = vst.msk [vmem:[%s188 + $0x30] sm:$0xff] %vm262, %v230
          %270 = vst.msk [vmem:[%s188 + $0x38] sm:$0xff] %vm262, %v233
          %271 = vst.msk [vmem:[%s193] sm:$0xff] %vm262, %v236
          %272 = vst.msk [vmem:[%s193 + $0x8] sm:$0xff] %vm262, %v239
          %273 = vst.msk [vmem:[%s193 + $0x10] sm:$0xff] %vm262, %v242
          %274 = vst.msk [vmem:[%s193 + $0x18] sm:$0xff] %vm262, %v245
          %275 = vst.msk [vmem:[%s193 + $0x20] sm:$0xff] %vm262, %v248
          %276 = vst.msk [vmem:[%s193 + $0x28] sm:$0xff] %vm262, %v251
          %277 = vst.msk [vmem:[%s193 + $0x30] sm:$0xff] %vm262, %v254
          %278 = vst.msk [vmem:[%s193 + $0x38] sm:$0xff] %vm262, %v257
        $region32: #{tpu_custom_call.1} parent=23 // pred_fallthru
          _
        %p279 = scmp.gt.s32.totalorder %s22, 0
        // Predicated region
        $region33: #{tpu_custom_call.1} parent=23 // pred_check
          %p280 = pneg %p279
        $region34: #{tpu_custom_call.1} parent=23 // pred_check_branch
          %282 = sbr.rel (%p280) target = $region36
        $region35: #{tpu_custom_call.1} parent=23 // pred_region
          %v283 = vld [vmem:[%s188] sm:$0xff]
          %v284 = vld [vmem:[%s188 + $0x8] sm:$0xff]
          %v285 = vld [vmem:[%s188 + $0x10] sm:$0xff]
          %v286 = vld [vmem:[%s188 + $0x18] sm:$0xff]
          %v287 = vld [vmem:[%s188 + $0x20] sm:$0xff]
          %v288 = vld [vmem:[%s188 + $0x28] sm:$0xff]
          %v289 = vld [vmem:[%s188 + $0x30] sm:$0xff]
          %v290 = vld [vmem:[%s188 + $0x38] sm:$0xff]
          %v291 = vadd.f32 %v283, %v212
          %v292 = vadd.f32 %v284, %v215
          %v293 = vadd.f32 %v285, %v218
          %v294 = vadd.f32 %v286, %v221
          %v295 = vadd.f32 %v287, %v224
          %v296 = vadd.f32 %v288, %v227
          %v297 = vadd.f32 %v289, %v230
          %v298 = vadd.f32 %v290, %v233
          %vm299 = vcmask 7168
          %300 = vst.msk [vmem:[%s188] sm:$0xff] %vm299, %v291
          %301 = vst.msk [vmem:[%s188 + $0x8] sm:$0xff] %vm299, %v292
          %302 = vst.msk [vmem:[%s188 + $0x10] sm:$0xff] %vm299, %v293
          %303 = vst.msk [vmem:[%s188 + $0x18] sm:$0xff] %vm299, %v294
          %304 = vst.msk [vmem:[%s188 + $0x20] sm:$0xff] %vm299, %v295
          %305 = vst.msk [vmem:[%s188 + $0x28] sm:$0xff] %vm299, %v296
          %306 = vst.msk [vmem:[%s188 + $0x30] sm:$0xff] %vm299, %v297
          %307 = vst.msk [vmem:[%s188 + $0x38] sm:$0xff] %vm299, %v298
          %v308 = vld [vmem:[%s193] sm:$0xff]
          %v309 = vld [vmem:[%s193 + $0x8] sm:$0xff]
          %v310 = vld [vmem:[%s193 + $0x10] sm:$0xff]
          %v311 = vld [vmem:[%s193 + $0x18] sm:$0xff]
          %v312 = vld [vmem:[%s193 + $0x20] sm:$0xff]
          %v313 = vld [vmem:[%s193 + $0x28] sm:$0xff]
          %v314 = vld [vmem:[%s193 + $0x30] sm:$0xff]
          %v315 = vld [vmem:[%s193 + $0x38] sm:$0xff]
          %v316 = vmax.f32 %v308, %v236
          %v317 = vmax.f32 %v309, %v239
          %v318 = vmax.f32 %v310, %v242
          %v319 = vmax.f32 %v311, %v245
          %v320 = vmax.f32 %v312, %v248
          %v321 = vmax.f32 %v313, %v251
          %v322 = vmax.f32 %v314, %v254
          %v323 = vmax.f32 %v315, %v257
          %324 = vst.msk [vmem:[%s193] sm:$0xff] %vm299, %v316
          %325 = vst.msk [vmem:[%s193 + $0x8] sm:$0xff] %vm299, %v317
          %326 = vst.msk [vmem:[%s193 + $0x10] sm:$0xff] %vm299, %v318
          %327 = vst.msk [vmem:[%s193 + $0x18] sm:$0xff] %vm299, %v319
          %328 = vst.msk [vmem:[%s193 + $0x20] sm:$0xff] %vm299, %v320
          %329 = vst.msk [vmem:[%s193 + $0x28] sm:$0xff] %vm299, %v321
          %330 = vst.msk [vmem:[%s193 + $0x30] sm:$0xff] %vm299, %v322
          %331 = vst.msk [vmem:[%s193 + $0x38] sm:$0xff] %vm299, %v323
        $region36: #{tpu_custom_call.1} parent=23 // pred_fallthru
          _
        %p332 = scmp.lt.s32.totalorder %s21, 1
        %s333 = scalar_select %p332, %s21, 1
        %s334 = smul.addr %s333, 8
        %s335 = smul.addr %s334, 8
        %s336 = scalar_lea.vmem %s1, %s335
        %p337 = scmp.lt.s32.totalorder %s21, 1
        %s338 = scalar_select %p337, %s21, 1
        %s339 = smul.addr %s338, 8
        %s340 = smul.addr %s339, 8
        %s341 = scalar_lea.vmem %s2, %s340
        // Predicated region
        $region37: #{tpu_custom_call.1} parent=23 // pred_check
          %p342 = pneg %p75
        $region38: #{tpu_custom_call.1} parent=23 // pred_check_branch
          %344 = sbr.rel (%p342) target = $region40
        $region39: #{tpu_custom_call.1} parent=23 // pred_region
          _
        $region40: #{tpu_custom_call.1} parent=23 // pred_fallthru
          _
        // Predicated region
        $region41: #{tpu_custom_call.1} parent=23 // pred_check
          %p345 = pneg %p101
        $region42: #{tpu_custom_call.1} parent=23 // pred_check_branch
          %347 = sbr.rel (%p345) target = $region44
        $region43: #{tpu_custom_call.1} parent=23 // pred_region
          _
        $region44: #{tpu_custom_call.1} parent=23 // pred_fallthru
          _
      $region24: #{tpu_custom_call.1} parent=5 // pred_fallthru
        _
      %p348 = scmp.le.s32.totalorder 2, %s12
      // Predicated region
      $region45: #{tpu_custom_call.1} parent=5 // pred_check
        %p349 = pneg %p348
      $region46: #{tpu_custom_call.1} parent=5 // pred_check_branch
        %351 = sbr.rel (%p349) target = $region48
      $region47: #{tpu_custom_call.1} parent=5 // pred_region
        %s352 = ssub.s32 %s12, 2
        // Predicated region
        $region49: #{tpu_custom_call.1} parent=47 // pred_check
          %p353 = pneg %p81
        $region50: #{tpu_custom_call.1} parent=47 // pred_check_branch
          %355 = sbr.rel (%p353) target = $region52
        $region51: #{tpu_custom_call.1} parent=47 // pred_region
          %p356 = scmp.lt.s32.totalorder %s23, 1
          %s357 = scalar_select %p356, %s23, 1
          %s358 = smul.addr %s357, 8
          %s359 = smul.addr %s358, 8
          %s360 = scalar_lea.vmem %s1, %s359
        $region52: #{tpu_custom_call.1} parent=47 // pred_fallthru
          _
        // Predicated region
        $region53: #{tpu_custom_call.1} parent=47 // pred_check
          %p361 = pneg %p107
        $region54: #{tpu_custom_call.1} parent=47 // pred_check_branch
          %363 = sbr.rel (%p361) target = $region56
        $region55: #{tpu_custom_call.1} parent=47 // pred_region
          %p364 = scmp.lt.s32.totalorder %s23, 1
          %s365 = scalar_select %p364, %s23, 1
          %s366 = smul.addr %s365, 8
          %s367 = smul.addr %s366, 8
          %s368 = scalar_lea.vmem %s2, %s367
        $region56: #{tpu_custom_call.1} parent=47 // pred_fallthru
          _
      $region48: #{tpu_custom_call.1} parent=5 // pred_fallthru
        _
    $region6: #{tpu_custom_call.1} parent=1 // loop_footer
      %s16 = sadd.s32 1, %s12
    $region7: #{tpu_custom_call.1} parent=1 // loop_footer_branch
      %11 = sbr.rel target = $region3
    $region8: #{tpu_custom_call.1} parent=1 // loop_exit
      _
    %369 = vsyncpa [#allocation3], 1
    %s370 = scalar_lea.sflag [#allocation3], 1
    %371 = vsyncpa %s370, 1

</llo_original>
